<compile_context>
chip_gen: v7x
topology: tpu7x:2x2x1
jax: 0.10.0
libtpu: 0.0.40
codegen_flags: <defaults>
</compile_context>

<pallas_src>
import functools

import jax
import jax.numpy as jnp
from jax.experimental import pallas as pl
from jax.experimental.pallas import tpu as pltpu


EPS = 1e-5          # nn.InstanceNorm2d default eps
NEG_SLOPE = 0.2     # LeakyReLU slope


def _cnnblock_kernel(patches_ref, w_ref, gamma_ref, beta_ref, out_ref, sum_ref,
                     *, n_p, tp, p_real):
    # patches_ref: (1, K_pad, TP)   w_ref: (TC, K_pad)
    # gamma/beta:  (TC, 1) f32      out_ref: (1, TC, P_pad) f32 (resident over P)
    # sum_ref:     (TC, TP) f32 lane-wise running per-channel partial sums
    p_idx = pl.program_id(2)

    # Convolution tile on the MXU: (TC, K_pad) @ (K_pad, TP) -> (TC, TP), f32 acc.
    y = jnp.dot(w_ref[...], patches_ref[0], preferred_element_type=jnp.float32)

    @pl.when(p_idx == 0)
    def _():
        sum_ref[...] = jnp.zeros_like(sum_ref)

    # Lane-wise partial sums: pure VALU adds, no per-step cross-lane reduce.
    sum_ref[...] += y

    # Write the conv tile straight into the resident output slab (lane-dense store).
    off = pl.multiple_of(p_idx * tp, 128)
    out_ref[0, :, pl.ds(off, tp)] = y

    # Last P step: InstanceNorm (two-pass variance) + affine + LeakyReLU in place.
    @pl.when(p_idx == n_p - 1)
    def _():
        inv_p = jnp.float32(1.0 / p_real)
        # Single cross-lane reduce for the mean.
        mean = jnp.sum(sum_ref[...], axis=1, keepdims=True) * inv_p     # (TC, 1)

        unroll = n_p <= 4

        # Pass 1: sum of squared deviations over the resident tiles (mask pad cols).
        def ssq_body(t, acc):
            o = pl.multiple_of(t * tp, 128)
            tile = out_ref[0, :, pl.ds(o, tp)]
            col = o + jax.lax.broadcasted_iota(jnp.int32, (1, tp), 1)
            d = jnp.where(col < p_real, tile - mean, 0.0)
            return acc + jnp.sum(d * d, axis=1, keepdims=True)

        ssq = jax.lax.fori_loop(0, n_p, ssq_body, jnp.zeros_like(mean),
                                unroll=unroll)
        var = ssq * inv_p                                               # biased var

        scale = gamma_ref[...] * jax.lax.rsqrt(var + EPS)               # (TC, 1)
        shift = beta_ref[...] - mean * scale                            # (TC, 1)

        # Pass 2: fused scale/shift + LeakyReLU, written back lane-dense.
        def norm_body(t, carry):
            o = pl.multiple_of(t * tp, 128)
            ya = out_ref[0, :, pl.ds(o, tp)] * scale + shift
            out_ref[0, :, pl.ds(o, tp)] = jnp.maximum(ya, NEG_SLOPE * ya).astype(
                out_ref.dtype)
            return carry

        jax.lax.fori_loop(0, n_p, norm_body, jnp.int32(0), unroll=unroll)


def _im2col(x_pad, kh, kw, stride):
    # x_pad: (N, C, Hp, Wp) -> patches (N, K, P), K = C*kh*kw, P = Ho*Wo.
    N, C, Hp, Wp = x_pad.shape
    Ho = (Hp - kh) // stride + 1
    Wo = (Wp - kw) // stride + 1
    slices = []
    for i in range(kh):
        for j in range(kw):
            slices.append(
                x_pad[:, :, i : i + stride * Ho : stride, j : j + stride * Wo : stride]
            )
    p = jnp.stack(slices, axis=2)                 # (N, C, kh*kw, Ho, Wo)
    p = p.reshape(N, C * kh * kw, Ho * Wo)        # channel-major K, matches weight flatten
    return p, Ho, Wo


def _round_up(a, m):
    return ((a + m - 1) // m) * m


def _vmem_capacity_bytes():
    try:
        return int(pltpu.get_tpu_info().vmem_capacity_bytes)
    except Exception:
        return 64 * 1024 * 1024      # conservative default (v7x per-TensorCore)


def _choose_c_tile(c_out):
    # Split C_out only when large; keep each chunk >= 256 to avoid MXU M-dim
    # underfill while giving v7x's second core work even when N == 1.
    if c_out > 256 and c_out % 256 == 0:
        return 256
    return c_out


def _choose_p_tile(k_pad, p, esize, c_tile, budget_bytes):
    """Pick lane tile TP (multiple of 128) so the full pipeline fits the VMEM budget."""
    p128 = _round_up(p, 128)
    for tp in (2048, 1024, 512, 256, 128):
        if tp > p128:
            continue
        p_pad = _round_up(p, tp)
        patch_tile = k_pad * tp * esize
        nbuf = 3 if patch_tile <= (2 << 20) else 2      # triple-buffer only when cheap
        usage = (nbuf * patch_tile                      # patch multi-buffer
                 + 2 * c_tile * k_pad * esize           # weights (conservative x2)
                 + 2 * c_tile * p_pad * 4               # resident f32 output slab (x2)
                 + c_tile * tp * 4)                     # lane-wise sum scratch
        if usage <= budget_bytes:
            return tp, p_pad, nbuf
    return 128, _round_up(p, 128), 2


def cnn_block_forward(x, weight, gamma, beta, stride):
    """x: (N, C_in, H, W). weight: (C_out, C_in, 4, 4). gamma/beta: (C_out,)."""
    N, C_in, H, W = x.shape
    C_out, _, kh, kw = weight.shape

    # Reflection padding (padding=1, padding_mode='reflect').
    x_pad = jnp.pad(x, ((0, 0), (0, 0), (1, 1), (1, 1)), mode="reflect")
    patches, Ho, Wo = _im2col(x_pad, kh, kw, stride)          # (N, K, P), x.dtype
    P = Ho * Wo
    K = C_in * kh * kw

    esize = jnp.dtype(x.dtype).itemsize
    sublane = {4: 8, 2: 16, 1: 32}.get(esize, 8)              # dtype sublane packing
    K_pad = _round_up(K, sublane)

    vmem_cap = _vmem_capacity_bytes()
    vmem_limit = min(int(vmem_cap * 0.625), 100 * 1024 * 1024)   # ~40 MiB on 64 MiB parts
    budget = max(vmem_limit - 6 * 1024 * 1024, 12 * 1024 * 1024)

    TC = _choose_c_tile(C_out)
    n_c = C_out // TC
    TP, P_pad, nbuf = _choose_p_tile(K_pad, P, esize, TC, budget)
    n_p = P_pad // TP

    # Zero padding: extra K rows contribute nothing to the matmul; extra P columns
    # produce exactly-zero conv outputs and are masked out of the statistics.
    patches = jnp.pad(patches, ((0, 0), (0, K_pad - K), (0, P_pad - P)))

    # Keep the MXU on the activation dtype (bf16 path when x is bf16); f32 accumulate.
    w_mat = weight.reshape(C_out, K).astype(x.dtype)
    w_mat = jnp.pad(w_mat, ((0, 0), (0, K_pad - K)))
    gamma2d = gamma.reshape(C_out, 1).astype(jnp.float32)
    beta2d = beta.reshape(C_out, 1).astype(jnp.float32)

    kernel = functools.partial(_cnnblock_kernel, n_p=n_p, tp=TP, p_real=P)

    def build(use_buffered):
        patch_kwargs = {}
        if use_buffered:
            patch_kwargs["pipeline_mode"] = pl.Buffered(nbuf)
        grid_spec = pltpu.PrefetchScalarGridSpec(
            num_scalar_prefetch=0,
            grid=(N, n_c, n_p),
            in_specs=[
                pl.BlockSpec((1, K_pad, TP), lambda n, c, p: (n, 0, p), **patch_kwargs),
                pl.BlockSpec((TC, K_pad), lambda n, c, p: (c, 0)),   # weights (resident)
                pl.BlockSpec((TC, 1), lambda n, c, p: (c, 0)),       # gamma
                pl.BlockSpec((TC, 1), lambda n, c, p: (c, 0)),       # beta
            ],
            out_specs=pl.BlockSpec((1, TC, P_pad), lambda n, c, p: (n, c, 0)),
            scratch_shapes=[pltpu.VMEM((TC, TP), jnp.float32)],      # lane-wise sums
        )
        return pl.pallas_call(
            kernel,
            out_shape=jax.ShapeDtypeStruct((N, C_out, P_pad), jnp.float32),
            grid_spec=grid_spec,
            compiler_params=pltpu.CompilerParams(
                dimension_semantics=("parallel", "parallel", "arbitrary"),
                vmem_limit_bytes=vmem_limit,
            ),
        )

    if nbuf >= 3:
        try:
            out = build(True)(patches, w_mat, gamma2d, beta2d)
        except Exception:   # fall back to the default 2-deep pipeline
            out = build(False)(patches, w_mat, gamma2d, beta2d)
    else:
        out = build(False)(patches, w_mat, gamma2d, beta2d)

    # (N, C_out, P) is already channel-major: slice off the P pad, plain reshape to NCHW.
    return out[:, :, :P].reshape(N, C_out, Ho, Wo).astype(x.dtype)


def _reference(x, weight, gamma, beta, stride):
    # Pure-JAX reference for sanity checking.
    x_pad = jnp.pad(x, ((0, 0), (0, 0), (1, 1), (1, 1)), mode="reflect")
    y = jax.lax.conv_general_dilated(
        x_pad, weight, window_strides=(stride, stride), padding="VALID",
        dimension_numbers=("NCHW", "OIHW", "NCHW"),
    )
    mean = jnp.mean(y, axis=(2, 3), keepdims=True)
    var = jnp.mean((y - mean) ** 2, axis=(2, 3), keepdims=True)
    y = (y - mean) * jax.lax.rsqrt(var + EPS)
    y = y * gamma.reshape(1, -1, 1, 1) + beta.reshape(1, -1, 1, 1)
    return jnp.where(y > 0, y, NEG_SLOPE * y)


if __name__ == "__main__":
    key = jax.random.PRNGKey(0)
    k_x, k_w, k_g, k_b = jax.random.split(key, 4)

    N, C_in, H, W = 2, 4, 16, 16
    C_out, stride = 8, 2

    x = jax.random.normal(k_x, (N, C_in, H, W), dtype=jnp.float32)
    weight = 0.1 * jax.random.normal(k_w, (C_out, C_in, 4, 4), dtype=jnp.float32)
    gamma = 1.0 + 0.1 * jax.random.normal(k_g, (C_out,), dtype=jnp.float32)
    beta = 0.1 * jax.random.normal(k_b, (C_out,), dtype=jnp.float32)

    out = cnn_block_forward(x, weight, gamma, beta, stride)
    out = jax.block_until_ready(out)

    ref = _reference(x, weight, gamma, beta, stride)
    assert out.shape == ref.shape, (out.shape, ref.shape)
    assert jnp.allclose(out, ref, atol=1e-4, rtol=1e-4), "mismatch vs reference"

    print("KERNEL_OK")
</pallas_src>

<mosaic_0001>
module attributes {stable_mosaic.version = 11 : i64} {
  func.func @_cnnblock_kernel(%arg0: i32, %arg1: i32, %arg2: i32, %arg3: memref<1x64x128xf32, #tpu.memory_space<vmem>>, %arg4: memref<8x64xf32, #tpu.memory_space<vmem>>, %arg5: memref<8x1xf32, #tpu.memory_space<vmem>>, %arg6: memref<8x1xf32, #tpu.memory_space<vmem>>, %arg7: memref<1x8x128xf32, #tpu.memory_space<vmem>>, %arg8: memref<8x128xf32, #tpu.memory_space<vmem>>) attributes {dimension_semantics = [#tpu.dimension_semantics<parallel>, #tpu.dimension_semantics<parallel>, #tpu.dimension_semantics<arbitrary>], iteration_bounds = array<i64: 2, 1, 1>, scalar_prefetch = 0 : i64, scratch_operands = 1 : i64, tpu.core_type = #tpu.core_type<tc>, window_params = [{transform_indices = @transform_0, window_bounds = array<i64: 1, 64, 128>}, {transform_indices = @transform_1, window_bounds = array<i64: 8, 64>}, {transform_indices = @transform_2, window_bounds = array<i64: 8, 1>}, {transform_indices = @transform_3, window_bounds = array<i64: 8, 1>}, {transform_indices = @transform_4, window_bounds = array<i64: 1, 8, 128>}]} {
    %c0 = arith.constant 0 : index
    %c0_0 = arith.constant 0 : index
    %0 = vector.load %arg4[%c0, %c0_0] : memref<8x64xf32, #tpu.memory_space<vmem>>, vector<8x64xf32>
    %c0_1 = arith.constant 0 : index
    %c0_2 = arith.constant 0 : index
    %c0_3 = arith.constant 0 : index
    %1 = vector.load %arg3[%c0_1, %c0_2, %c0_3] : memref<1x64x128xf32, #tpu.memory_space<vmem>>, vector<1x64x128xf32>
    %2 = vector.shape_cast %1 : vector<1x64x128xf32> to vector<64x128xf32>
    %cst = arith.constant dense<0.000000e+00> : vector<8x128xf32>
    %3 = tpu.matmul %0, %2, %cst {dimension_numbers = #tpu.dot_dimension_numbers<[1], [0], [0], [1], [0, 0, 1, 1], [], []>} : vector<8x64xf32>, vector<64x128xf32>, vector<8x128xf32> -> vector<8x128xf32>
    %c0_i32 = arith.constant 0 : i32
    %4 = arith.cmpi eq, %arg2, %c0_i32 : i32
    %5 = arith.extui %4 : i1 to i32
    %c0_i32_4 = arith.constant 0 : i32
    %6 = arith.cmpi ne, %5, %c0_i32_4 : i32
    scf.if %6 {
      %cst_13 = arith.constant 0.000000e+00 : f32
      %19 = vector.broadcast %cst_13 : f32 to vector<8x128xf32>
      %c0_14 = arith.constant 0 : index
      %c0_15 = arith.constant 0 : index
      %20 = vector.load %arg8[%c0_14, %c0_15] : memref<8x128xf32, #tpu.memory_space<vmem>>, vector<8x128xf32>
      tpu.vector_store %arg8[%c0_14, %c0_15], %19 {strides = array<i32>} : memref<8x128xf32, #tpu.memory_space<vmem>>, vector<8x128xf32>,
    } else {
    }
    %c0_5 = arith.constant 0 : index
    %c0_6 = arith.constant 0 : index
    %7 = vector.load %arg8[%c0_5, %c0_6] : memref<8x128xf32, #tpu.memory_space<vmem>>, vector<8x128xf32>
    %8 = arith.addf %7, %3 : vector<8x128xf32>
    %c0_7 = arith.constant 0 : index
    %c0_8 = arith.constant 0 : index
    %9 = vector.load %arg8[%c0_7, %c0_8] : memref<8x128xf32, #tpu.memory_space<vmem>>, vector<8x128xf32>
    tpu.vector_store %arg8[%c0_7, %c0_8], %8 {strides = array<i32>} : memref<8x128xf32, #tpu.memory_space<vmem>>, vector<8x128xf32>,
    %c128_i32 = arith.constant 128 : i32
    %10 = arith.muli %arg2, %c128_i32 : i32
    %11 = tpu.assume_multiple %10, 128 : i32
    %c0_9 = arith.constant 0 : index
    %c0_10 = arith.constant 0 : index
    %12 = arith.index_cast %11 : i32 to index
    %13 = vector.load %arg7[%c0_9, %c0_10, %12] : memref<1x8x128xf32, #tpu.memory_space<vmem>>, vector<1x8x128xf32>
    %14 = vector.shape_cast %13 : vector<1x8x128xf32> to vector<8x128xf32>
    %15 = vector.shape_cast %3 : vector<8x128xf32> to vector<1x8x128xf32>
    tpu.vector_store %arg7[%c0_9, %c0_10, %12], %15 {strides = array<i32>} : memref<1x8x128xf32, #tpu.memory_space<vmem>>, vector<1x8x128xf32>,
    %c0_i32_11 = arith.constant 0 : i32
    %16 = arith.cmpi eq, %arg2, %c0_i32_11 : i32
    %17 = arith.extui %16 : i1 to i32
    %c0_i32_12 = arith.constant 0 : i32
    %18 = arith.cmpi ne, %17, %c0_i32_12 : i32
    scf.if %18 {
      %c0_13 = arith.constant 0 : index
      %c0_14 = arith.constant 0 : index
      %19 = vector.load %arg8[%c0_13, %c0_14] : memref<8x128xf32, #tpu.memory_space<vmem>>, vector<8x128xf32>
      %cst_15 = arith.constant dense<0.000000e+00> : vector<8xf32>
      %20 = vector.multi_reduction <add>, %19, %cst_15 [1] : vector<8x128xf32> to vector<8xf32>
      %21 = vector.shape_cast %20 : vector<8xf32> to vector<8x1xf32>
      %cst_16 = arith.constant 1.562500e-02 : f32
      %22 = vector.broadcast %cst_16 : f32 to vector<8x1xf32>
      %23 = arith.mulf %21, %22 : vector<8x1xf32>
      %cst_17 = arith.constant 0.000000e+00 : f32
      %24 = vector.broadcast %cst_17 : f32 to vector<8x1xf32>
      %c0_i32_18 = arith.constant 0 : i32
      %c128_i32_19 = arith.constant 128 : i32
      %25 = arith.muli %c0_i32_18, %c128_i32_19 : i32
      %26 = tpu.assume_multiple %25, 128 : i32
      %c0_20 = arith.constant 0 : index
      %c0_21 = arith.constant 0 : index
      %27 = arith.index_cast %26 : i32 to index
      %28 = vector.load %arg7[%c0_20, %c0_21, %27] : memref<1x8x128xf32, #tpu.memory_space<vmem>>, vector<1x8x128xf32>
      %29 = vector.shape_cast %28 : vector<1x8x128xf32> to vector<8x128xf32>
      %30 = tpu.iota {dimensions = array<i32: 1>} : vector<1x128xi32>
      %31 = vector.broadcast %26 : i32 to vector<1x128xi32>
      %32 = arith.addi %31, %30 : vector<1x128xi32>
      %c64_i32 = arith.constant 64 : i32
      %33 = vector.broadcast %c64_i32 : i32 to vector<1x128xi32>
      %34 = arith.cmpi slt, %32, %33 : vector<1x128xi32>
      %35 = vector.broadcast %23 : vector<8x1xf32> to vector<8x128xf32>
      %36 = arith.subf %29, %35 : vector<8x128xf32>
      %cst_22 = arith.constant 0.000000e+00 : f32
      %37 = vector.shape_cast %34 : vector<1x128xi1> to vector<1x128xi1>
      %38 = vector.broadcast %37 : vector<1x128xi1> to vector<8x128xi1>
      %39 = vector.broadcast %cst_22 : f32 to vector<8x128xf32>
      %40 = arith.select %38, %36, %39 : vector<8x128xi1>, vector<8x128xf32>
      %41 = arith.mulf %40, %40 : vector<8x128xf32>
      %cst_23 = arith.constant dense<0.000000e+00> : vector<8xf32>
      %42 = vector.multi_reduction <add>, %41, %cst_23 [1] : vector<8x128xf32> to vector<8xf32>
      %43 = vector.shape_cast %42 : vector<8xf32> to vector<8x1xf32>
      %44 = arith.addf %24, %43 : vector<8x1xf32>
      %c1_i32 = arith.constant 1 : i32
      %cst_24 = arith.constant 1.562500e-02 : f32
      %45 = vector.broadcast %cst_24 : f32 to vector<8x1xf32>
      %46 = arith.mulf %44, %45 : vector<8x1xf32>
      %c0_25 = arith.constant 0 : index
      %c0_26 = arith.constant 0 : index
      %47 = vector.load %arg5[%c0_25, %c0_26] : memref<8x1xf32, #tpu.memory_space<vmem>>, vector<8x1xf32>
      %cst_27 = arith.constant 9.99999974E-6 : f32
      %48 = vector.broadcast %cst_27 : f32 to vector<8x1xf32>
      %49 = arith.addf %46, %48 : vector<8x1xf32>
      %50 = math.rsqrt %49 : vector<8x1xf32>
      %51 = arith.mulf %47, %50 : vector<8x1xf32>
      %c0_28 = arith.constant 0 : index
      %c0_29 = arith.constant 0 : index
      %52 = vector.load %arg6[%c0_28, %c0_29] : memref<8x1xf32, #tpu.memory_space<vmem>>, vector<8x1xf32>
      %53 = arith.mulf %23, %51 : vector<8x1xf32>
      %54 = arith.subf %52, %53 : vector<8x1xf32>
      %c0_i32_30 = arith.constant 0 : i32
      %c128_i32_31 = arith.constant 128 : i32
      %55 = arith.muli %c0_i32_30, %c128_i32_31 : i32
      %56 = tpu.assume_multiple %55, 128 : i32
      %c0_32 = arith.constant 0 : index
      %c0_33 = arith.constant 0 : index
      %57 = arith.index_cast %56 : i32 to index
      %58 = vector.load %arg7[%c0_32, %c0_33, %57] : memref<1x8x128xf32, #tpu.memory_space<vmem>>, vector<1x8x128xf32>
      %59 = vector.shape_cast %58 : vector<1x8x128xf32> to vector<8x128xf32>
      %60 = vector.broadcast %51 : vector<8x1xf32> to vector<8x128xf32>
      %61 = arith.mulf %59, %60 : vector<8x128xf32>
      %62 = vector.broadcast %54 : vector<8x1xf32> to vector<8x128xf32>
      %63 = arith.addf %61, %62 : vector<8x128xf32>
      %cst_34 = arith.constant 2.000000e-01 : f32
      %64 = vector.broadcast %cst_34 : f32 to vector<8x128xf32>
      %65 = arith.mulf %64, %63 : vector<8x128xf32>
      %66 = arith.maximumf %63, %65 : vector<8x128xf32>
      %c0_35 = arith.constant 0 : index
      %c0_36 = arith.constant 0 : index
      %67 = arith.index_cast %56 : i32 to index
      %68 = vector.load %arg7[%c0_35, %c0_36, %67] : memref<1x8x128xf32, #tpu.memory_space<vmem>>, vector<1x8x128xf32>
      %69 = vector.shape_cast %68 : vector<1x8x128xf32> to vector<8x128xf32>
      %70 = vector.shape_cast %66 : vector<8x128xf32> to vector<1x8x128xf32>
      tpu.vector_store %arg7[%c0_35, %c0_36, %67], %70 {strides = array<i32>} : memref<1x8x128xf32, #tpu.memory_space<vmem>>, vector<1x8x128xf32>,
      %c1_i32_37 = arith.constant 1 : i32
    } else {
    }
    return
  }
  func.func @transform_0(%arg0: i32, %arg1: i32, %arg2: i32) -> (i32, i32, i32) {
    %c0_i32 = arith.constant 0 : i32
    %c0_i32_0 = arith.constant 0 : i32
    return %arg0, %c0_i32, %arg2 : i32, i32, i32
  }
  func.func @transform_1(%arg0: i32, %arg1: i32, %arg2: i32) -> (i32, i32) {
    %c0_i32 = arith.constant 0 : i32
    %c0_i32_0 = arith.constant 0 : i32
    return %arg1, %c0_i32 : i32, i32
  }
  func.func @transform_2(%arg0: i32, %arg1: i32, %arg2: i32) -> (i32, i32) {
    %c0_i32 = arith.constant 0 : i32
    %c0_i32_0 = arith.constant 0 : i32
    return %arg1, %c0_i32 : i32, i32
  }
  func.func @transform_3(%arg0: i32, %arg1: i32, %arg2: i32) -> (i32, i32) {
    %c0_i32 = arith.constant 0 : i32
    %c0_i32_0 = arith.constant 0 : i32
    return %arg1, %c0_i32 : i32, i32
  }
  func.func @transform_4(%arg0: i32, %arg1: i32, %arg2: i32) -> (i32, i32, i32) {
    %c0_i32 = arith.constant 0 : i32
    %c0_i32_0 = arith.constant 0 : i32
    return %arg0, %arg1, %c0_i32 : i32, i32, i32
  }
}

</mosaic_0001>

<llo_original>
// kernel: tpu_custom_call.1
$region0: #{tpu_custom_call.1}
  #allocation0 [shape = 'u32[]', space=smem, size = 0x4, offset = 0x4, fixed_abs, tag = 'smem constant byte address 0x4 - core index']
  #allocation1 [shape = 'u32[144,128]{1,0:T(1,128)}', space=vmem, size = 0x12000, scoped, tag = 'internal scratch']
  #allocation2 [shape = 'f32[8,128]{1,0:T(8,128)}', space=vmem, size = 0x1000, scoped, tag = 'scratch operand']
  %s0 = inlined_call_operand.hbm [shape: f32[2,64,128], index: 0, kind: input, shape index: {}]
  %s1 = inlined_call_operand.vmem [shape: f32[8,64], index: 1, kind: input, shape index: {}]
  %s2 = inlined_call_operand.vmem [shape: f32[8,1], index: 2, kind: input, shape index: {}]
  %s3 = inlined_call_operand.vmem [shape: f32[8,1], index: 3, kind: input, shape index: {}]
  %s4 = inlined_call_operand.hbm [shape: f32[2,8,128], index: 4, kind: output, shape index: {}]
  %s5 = sld [smem:[#allocation0]]
  $region61: #{tpu_custom_call.1} parent=0
    _
  %s7 = ssub.s32 1, %s5
  %s8 = scalar_select 0, %s7, %s5
  $region1: #{tpu_custom_call.1} parent=0
    #allocation3 [shape = 'u8[65536]{0}', space=vmem, size = 0x10000, scoped, tag = 'input window, operand 0']
    #allocation4 [shape = 's32[2]{0}', space=sflag, size = 0x8, scoped, tag = 'scoped memory for tpu_custom_call.1']
    #allocation5 [shape = 's32[2]{0}', space=sflag, size = 0x8, scoped, tag = 'scoped memory for tpu_custom_call.1']
    #allocation6 [shape = 'u8[8192]{0}', space=vmem, size = 0x2000, scoped, tag = 'output window, operand 0']
    %9 = vsyncpa [#allocation4], 0
    %s10 = scalar_lea.sflag [#allocation4], 1
    %11 = vsyncpa %s10, 0
    %12 = vsyncpa [#allocation5], 0
    %s13 = scalar_lea.sflag [#allocation5], 1
    %14 = vsyncpa %s13, 0
    loop: start=0, step=1, limit=4
    $region2: #{tpu_custom_call.1} parent=1 // loop_pre_header
      _
    $region3: #{tpu_custom_call.1} parent=1 // loop_header
      %s16 = sphi 0, %s20
      %p17 = scmp.ge.s32.totalorder %s16, 4
      %s23 = sphi 0, %s42
      %s24 = sphi 0, %s38
      %s25 = sphi 0, %s34
      %s26 = sphi 0, %s23
      %s27 = sphi 0, %s24
      %s28 = sphi 0, %s25
      %s29 = sphi 0, %s26
      %s30 = sphi 0, %s27
      %s31 = sphi 0, %s28
      %s47 = sphi 0, %s49
      %s50 = sphi 0, %s47
      %s51 = sphi 0, %s50
      %s67 = sphi 0, %s51
      %s73 = sphi 0, %s75
      %s76 = sphi 0, %s73
      %s77 = sphi 0, %s76
      %s93 = sphi 0, %s77
      %s99 = sphi 0, %s101
      %s102 = sphi 0, %s99
      %s103 = sphi 0, %s102
      %s119 = sphi 0, %s103
      %s125 = sphi 0, %s127
      %s128 = sphi 0, %s125
      %s129 = sphi 0, %s128
      %s145 = sphi 0, %s129
      %s153 = sphi 0, %s155
      %s156 = sphi 0, %s153
      %s157 = sphi 0, %s156
      %s173 = sphi 0, %s157
    $region4: #{tpu_custom_call.1} parent=1 // loop_header_branch
      %19 = sbr.rel (%p17) target = $region8
    $region5: #{tpu_custom_call.1} parent=1 // loop_body
      %s21 = ssub.s32 %s16, 1
      %s22 = ssub.s32 %s16, 2
      %s32 = sadd.s32 1, %s25
      %p33 = scmp.ge.s32.totalorder %s32, 1
      %s34 = scalar_select %p33, 0, %s32
      %s35 = sadd.s32 1, %s24
      %s36 = scalar_select %p33, %s35, %s24
      %p37 = scmp.ge.s32.totalorder %s36, 1
      %s38 = scalar_select %p37, 0, %s36
      %s39 = sadd.s32 1, %s23
      %s40 = scalar_select %p37, %s39, %s23
      %p41 = scmp.ge.s32.totalorder %s40, 2
      %s42 = scalar_select %p41, 0, %s40
      %s43 = ssub.s32 %s23, %s42
      %s44 = ssub.s32 %s25, %s34
      %s45 = sor.u32 %s43, %s44
      %p46 = scmp.eq.s32.totalorder %s45, 0
      %s48 = sadd.s32 %s47, 1
      %s49 = scalar_select %p46, %s47, %s48
      %p52 = pneg %p46
      %p53 = scmp.eq.s32.totalorder %s16, 1
      %p54 = por %p52, %p53
      %p55 = scmp.ne.s32.totalorder %s47, %s50
      %p56 = scmp.eq.s32.totalorder %s16, 0
      %p57 = por %p55, %p56
      %p58 = scmp.ne.s32.totalorder %s47, %s50
      %p59 = scmp.eq.s32.totalorder %s21, 1
      %p60 = por %p58, %p59
      %p61 = scmp.ne.s32.totalorder %s50, %s51
      %p62 = scmp.eq.s32.totalorder %s21, 0
      %p63 = por %p61, %p62
      %p64 = scmp.ne.s32.totalorder %s50, %s51
      %p65 = scmp.eq.s32.totalorder %s22, 1
      %p66 = por %p64, %p65
      %p68 = scmp.ne.s32.totalorder %s51, %s67
      %p69 = scmp.eq.s32.totalorder %s22, 0
      %p70 = por %p68, %p69
      %s71 = ssub.s32 %s24, %s38
      %p72 = scmp.eq.s32.totalorder %s71, 0
      %s74 = sadd.s32 %s73, 1
      %s75 = scalar_select %p72, %s73, %s74
      %p78 = pneg %p72
      %p79 = scmp.eq.s32.totalorder %s16, 1
      %p80 = por %p78, %p79
      %p81 = scmp.ne.s32.totalorder %s73, %s76
      %p82 = scmp.eq.s32.totalorder %s16, 0
      %p83 = por %p81, %p82
      %p84 = scmp.ne.s32.totalorder %s73, %s76
      %p85 = scmp.eq.s32.totalorder %s21, 1
      %p86 = por %p84, %p85
      %p87 = scmp.ne.s32.totalorder %s76, %s77
      %p88 = scmp.eq.s32.totalorder %s21, 0
      %p89 = por %p87, %p88
      %p90 = scmp.ne.s32.totalorder %s76, %s77
      %p91 = scmp.eq.s32.totalorder %s22, 1
      %p92 = por %p90, %p91
      %p94 = scmp.ne.s32.totalorder %s77, %s93
      %p95 = scmp.eq.s32.totalorder %s22, 0
      %p96 = por %p94, %p95
      %s97 = ssub.s32 %s24, %s38
      %p98 = scmp.eq.s32.totalorder %s97, 0
      %s100 = sadd.s32 %s99, 1
      %s101 = scalar_select %p98, %s99, %s100
      %p104 = pneg %p98
      %p105 = scmp.eq.s32.totalorder %s16, 1
      %p106 = por %p104, %p105
      %p107 = scmp.ne.s32.totalorder %s99, %s102
      %p108 = scmp.eq.s32.totalorder %s16, 0
      %p109 = por %p107, %p108
      %p110 = scmp.ne.s32.totalorder %s99, %s102
      %p111 = scmp.eq.s32.totalorder %s21, 1
      %p112 = por %p110, %p111
      %p113 = scmp.ne.s32.totalorder %s102, %s103
      %p114 = scmp.eq.s32.totalorder %s21, 0
      %p115 = por %p113, %p114
      %p116 = scmp.ne.s32.totalorder %s102, %s103
      %p117 = scmp.eq.s32.totalorder %s22, 1
      %p118 = por %p116, %p117
      %p120 = scmp.ne.s32.totalorder %s103, %s119
      %p121 = scmp.eq.s32.totalorder %s22, 0
      %p122 = por %p120, %p121
      %s123 = ssub.s32 %s24, %s38
      %p124 = scmp.eq.s32.totalorder %s123, 0
      %s126 = sadd.s32 %s125, 1
      %s127 = scalar_select %p124, %s125, %s126
      %p130 = pneg %p124
      %p131 = scmp.eq.s32.totalorder %s16, 1
      %p132 = por %p130, %p131
      %p133 = scmp.ne.s32.totalorder %s125, %s128
      %p134 = scmp.eq.s32.totalorder %s16, 0
      %p135 = por %p133, %p134
      %p136 = scmp.ne.s32.totalorder %s125, %s128
      %p137 = scmp.eq.s32.totalorder %s21, 1
      %p138 = por %p136, %p137
      %p139 = scmp.ne.s32.totalorder %s128, %s129
      %p140 = scmp.eq.s32.totalorder %s21, 0
      %p141 = por %p139, %p140
      %p142 = scmp.ne.s32.totalorder %s128, %s129
      %p143 = scmp.eq.s32.totalorder %s22, 1
      %p144 = por %p142, %p143
      %p146 = scmp.ne.s32.totalorder %s129, %s145
      %p147 = scmp.eq.s32.totalorder %s22, 0
      %p148 = por %p146, %p147
      %s149 = ssub.s32 %s23, %s42
      %s150 = ssub.s32 %s24, %s38
      %s151 = sor.u32 %s149, %s150
      %p152 = scmp.eq.s32.totalorder %s151, 0
      %s154 = sadd.s32 %s153, 1
      %s155 = scalar_select %p152, %s153, %s154
      %p158 = pneg %p152
      %p159 = scmp.eq.s32.totalorder %s16, 1
      %p160 = por %p158, %p159
      %p161 = scmp.ne.s32.totalorder %s153, %s156
      %p162 = scmp.eq.s32.totalorder %s16, 0
      %p163 = por %p161, %p162
      %p164 = scmp.ne.s32.totalorder %s153, %s156
      %p165 = scmp.eq.s32.totalorder %s21, 1
      %p166 = por %p164, %p165
      %p167 = scmp.ne.s32.totalorder %s156, %s157
      %p168 = scmp.eq.s32.totalorder %s21, 0
      %p169 = por %p167, %p168
      %p170 = scmp.ne.s32.totalorder %s156, %s157
      %p171 = scmp.eq.s32.totalorder %s22, 1
      %p172 = por %p170, %p171
      %p174 = scmp.ne.s32.totalorder %s157, %s173
      %p175 = scmp.eq.s32.totalorder %s22, 0
      %p176 = por %p174, %p175
      %p177 = scmp.le.s32.totalorder 1, %s16
      %p178 = scmp.lt.s32.totalorder %s16, 3
      %p179 = pnand %p177, %p178
      %p180 = pneg %p179
      // Predicated region
      $region9: #{tpu_custom_call.1} parent=5 // pred_check
        _
      $region10: #{tpu_custom_call.1} parent=5 // pred_check_branch
        %182 = sbr.rel (%p179) target = $region12
      $region11: #{tpu_custom_call.1} parent=5 // pred_region
        %s183 = ssub.s32 %s16, 1
        // Predicated region
        $region13: #{tpu_custom_call.1} parent=11 // pred_check
          %p184 = pneg %p89
        $region14: #{tpu_custom_call.1} parent=11 // pred_check_branch
          %186 = sbr.rel (%p184) target = $region16
        $region15: #{tpu_custom_call.1} parent=11 // pred_region
          %p187 = scmp.lt.s32.totalorder %s27, 0
          %s188 = scalar_select %p187, %s27, 0
          %s189 = smul.addr %s188, 8
          %s190 = scalar_lea.vmem %s1, %s189
        $region16: #{tpu_custom_call.1} parent=11 // pred_fallthru
          _
        // Predicated region
        $region17: #{tpu_custom_call.1} parent=11 // pred_check
          %p191 = pneg %p115
        $region18: #{tpu_custom_call.1} parent=11 // pred_check_branch
          %193 = sbr.rel (%p191) target = $region20
        $region19: #{tpu_custom_call.1} parent=11 // pred_region
          %p194 = scmp.lt.s32.totalorder %s27, 0
          %s195 = scalar_select %p194, %s27, 0
          %s196 = smul.addr %s195, 8
          %s197 = scalar_lea.vmem %s2, %s196
        $region20: #{tpu_custom_call.1} parent=11 // pred_fallthru
          _
        // Predicated region
        $region21: #{tpu_custom_call.1} parent=11 // pred_check
          %p198 = pneg %p141
        $region22: #{tpu_custom_call.1} parent=11 // pred_check_branch
          %200 = sbr.rel (%p198) target = $region24
        $region23: #{tpu_custom_call.1} parent=11 // pred_region
          %p201 = scmp.lt.s32.totalorder %s27, 0
          %s202 = scalar_select %p201, %s27, 0
          %s203 = smul.addr %s202, 8
          %s204 = scalar_lea.vmem %s3, %s203
        $region24: #{tpu_custom_call.1} parent=11 // pred_fallthru
          _
      $region12: #{tpu_custom_call.1} parent=5 // pred_fallthru
        _
      %p205 = scmp.lt.s32.totalorder %s16, 2
      // Predicated region
      $region25: #{tpu_custom_call.1} parent=5 // pred_check
        %p206 = pneg %p205
      $region26: #{tpu_custom_call.1} parent=5 // pred_check_branch
        %208 = sbr.rel (%p206) target = $region28
      $region27: #{tpu_custom_call.1} parent=5 // pred_region
        // Predicated region
        $region29: #{tpu_custom_call.1} parent=27 // pred_check
          %p209 = pneg %p57
        $region30: #{tpu_custom_call.1} parent=27 // pred_check_branch
          %211 = sbr.rel (%p209) target = $region32
        $region31: #{tpu_custom_call.1} parent=27 // pred_region
          %s212 = sand.u32 %s47, 1
          %s213 = scalar_lea.sflag [#allocation4], %s212
          %s214 = sand.u32 %s47, 1
          %s215 = smul.addr %s214, 64
          %s216 = scalar_lea.vmem [#allocation3], %s215
          %s218 = ssub.s32 1024, 1024
          %219 = vsyncadd %s213, %s218
          %s220 = smul.addr %s23, 8
          %s221 = sadd.s32 %s25, %s220
          %s222 = smul.addr %s221, 128
          %s223 = scalar_lea.hbm %s0, %s222
          %s224 = sshll.u32 %s216, 4
          %s225 = int_to_ptr.vmem [resolvable:$true] %s224
          %230 = dma.hbm_to_vmem [thread:$0]  %s223, 1024, %s225, %s213, 128, 128, 8
        $region32: #{tpu_custom_call.1} parent=27 // pred_fallthru
          _
      $region28: #{tpu_custom_call.1} parent=5 // pred_fallthru
        _
      %p231 = scmp.le.s32.totalorder 1, %s16
      %p232 = scmp.lt.s32.totalorder %s16, 3
      %p233 = pnand %p231, %p232
      %p234 = pneg %p233
      // Predicated region
      $region33: #{tpu_custom_call.1} parent=5 // pred_check
        _
      $region34: #{tpu_custom_call.1} parent=5 // pred_check_branch
        %236 = sbr.rel (%p233) target = $region36
      $region35: #{tpu_custom_call.1} parent=5 // pred_region
        %s237 = ssub.s32 %s16, 1
        %s238 = sand.u32 %s50, 1
        %s239 = scalar_lea.sflag [#allocation4], %s238
        %s240 = sand.u32 %s50, 1
        %s241 = smul.addr %s240, 64
        %s242 = scalar_lea.vmem [#allocation3], %s241
        // Predicated region
        $region37: #{tpu_custom_call.1} parent=35 // pred_check
          %p243 = pneg %p63
        $region38: #{tpu_custom_call.1} parent=35 // pred_check_branch
          %245 = sbr.rel (%p243) target = $region40
        $region39: #{tpu_custom_call.1} parent=35 // pred_region
          %246 = dma.done %s239, 1024
        $region40: #{tpu_custom_call.1} parent=35 // pred_fallthru
          _
        %s247 = sand.u32 %s50, 1
        %s248 = scalar_lea.sflag [#allocation4], %s247
        %s249 = sand.u32 %s50, 1
        %s250 = smul.addr %s249, 64
        %s251 = scalar_lea.vmem [#allocation3], %s250
        %p252 = pneg %p63
        %p253 = pneg %p60
        %p254 = scmp.lt.s32.totalorder %s27, 0
        %s255 = scalar_select %p254, %s27, 0
        %s256 = smul.addr %s255, 8
        %s257 = scalar_lea.vmem %s1, %s256
        %p258 = pneg %p89
        %p259 = pneg %p86
        %p260 = scmp.lt.s32.totalorder %s27, 0
        %s261 = scalar_select %p260, %s27, 0
        %s262 = smul.addr %s261, 8
        %s263 = scalar_lea.vmem %s2, %s262
        %p264 = pneg %p115
        %p265 = pneg %p112
        %p266 = scmp.lt.s32.totalorder %s27, 0
        %s267 = scalar_select %p266, %s27, 0
        %s268 = smul.addr %s267, 8
        %s269 = scalar_lea.vmem %s3, %s268
        %p270 = pneg %p141
        %p271 = pneg %p138
        %p272 = pneg %p169
        %p273 = pneg %p166
        %s274 = sand.u32 %s156, 1
        %s275 = scalar_lea.sflag [#allocation5], %s274
        %s276 = sand.u32 %s156, 1
        %s277 = smul.addr %s276, 8
        %s278 = scalar_lea.vmem [#allocation6], %s277
        %p279 = scmp.lt.s32.totalorder %s27, 0
        %s280 = scalar_select %p279, %s27, 0
        %s281 = smul.addr %s280, 8
        %s282 = scalar_lea.vmem %s1, %s281
        %p283 = scmp.lt.s32.totalorder %s27, 0
        %s284 = scalar_select %p283, %s27, 0
        %s285 = smul.addr %s284, 8
        %s286 = scalar_lea.vmem %s2, %s285
        %p287 = scmp.lt.s32.totalorder %s27, 0
        %s288 = scalar_select %p287, %s27, 0
        %s289 = smul.addr %s288, 8
        %s290 = scalar_lea.vmem %s3, %s289
        %v291 = vld [vmem:[%s282] sm:$0xff]
        %v292 = vld [vmem:[%s242] sm:$0xff]
        %v293 = vld [vmem:[%s242 + $0x8] sm:$0xff]
        %v294 = vld [vmem:[%s242 + $0x10] sm:$0xff]
        %v295 = vld [vmem:[%s242 + $0x18] sm:$0xff]
        %v296 = vld [vmem:[%s242 + $0x20] sm:$0xff]
        %v297 = vld [vmem:[%s242 + $0x28] sm:$0xff]
        %v298 = vld [vmem:[%s242 + $0x30] sm:$0xff]
        %v299 = vld [vmem:[%s242 + $0x38] sm:$0xff]
        %vm300 = vcmask 523264
        %v302 = vsel %vm300, %v291, 0
        %304 = vmatprep.subr.mxu0 0.0
        %305 = vmatpush1.msra.mxu0 %v292
        %306 = vmatprep.subr.mxu0 0.0
        %307 = vmatpush1.msra.mxu0 %v293
        %308 = vmatprep.subr.mxu0 0.0
        %309 = vmatpush1.msra.mxu0 %v294
        %310 = vmatprep.subr.mxu0 0.0
        %311 = vmatpush1.msra.mxu0 %v295
        %312 = vmatprep.subr.mxu0 0.0
        %313 = vmatpush1.msra.mxu0 %v296
        %314 = vmatprep.subr.mxu0 0.0
        %315 = vmatpush1.msra.mxu0 %v297
        %316 = vmatprep.subr.mxu0 0.0
        %317 = vmatpush1.msra.mxu0 %v298
        %318 = vmatprep.subr.mxu0 0.0
        %319 = vmatpush1.msra.mxu0 %v299
        %320 = vmatprep.subr.mxu0 0.0
        %321 = vmatpush1.msra.mxu0 0.0
        %322 = vmatprep.subr.mxu0 0.0
        %323 = vmatpush1.msra.mxu0 0.0
        %324 = vmatprep.subr.mxu0 0.0
        %325 = vmatpush1.msra.mxu0 0.0
        %326 = vmatprep.subr.mxu0 0.0
        %327 = vmatpush1.msra.mxu0 0.0
        %328 = vmatprep.subr.mxu0 0.0
        %329 = vmatpush1.msra.mxu0 0.0
        %330 = vmatprep.subr.mxu0 0.0
        %331 = vmatpush1.msra.mxu0 0.0
        %332 = vmatprep.subr.mxu0 0.0
        %333 = vmatpush1.msra.mxu0 0.0
        %334 = vmatprep.subr.mxu0 0.0
        %335 = vmatpush1.msra.mxu0 0.0
        %336 = vmatprep.subr.mxu0 0.0
        %337 = vmatpush1.msra.mxu0 0.0
        %338 = vmatprep.subr.mxu0 0.0
        %339 = vmatpush1.msra.mxu0 0.0
        %340 = vmatprep.subr.mxu0 0.0
        %341 = vmatpush1.msra.mxu0 0.0
        %342 = vmatprep.subr.mxu0 0.0
        %343 = vmatpush1.msra.mxu0 0.0
        %344 = vmatprep.subr.mxu0 0.0
        %345 = vmatpush1.msra.mxu0 0.0
        %346 = vmatprep.subr.mxu0 0.0
        %347 = vmatpush1.msra.mxu0 0.0
        %348 = vmatprep.subr.mxu0 0.0
        %349 = vmatpush1.msra.mxu0 0.0
        %350 = vmatprep.subr.mxu0 0.0
        %351 = vmatpush1.msra.mxu0 0.0
        %352 = vmatprep.subr.mxu0 0.0
        %353 = vmatpush1.msra.mxu0 0.0
        %354 = vmatprep.subr.mxu0 0.0
        %355 = vmatpush1.msra.mxu0 0.0
        %356 = vmatprep.subr.mxu0 0.0
        %357 = vmatpush1.msra.mxu0 0.0
        %358 = vmatprep.subr.mxu0 0.0
        %359 = vmatpush1.msra.mxu0 0.0
        %360 = vmatprep.subr.mxu0 0.0
        %361 = vmatpush1.msra.mxu0 0.0
        %362 = vmatprep.subr.mxu0 0.0
        %363 = vmatpush1.msra.mxu0 0.0
        %364 = vmatprep.subr.mxu0 0.0
        %365 = vmatpush1.msra.mxu0 0.0
        %366 = vmatprep.subr.mxu0 0.0
        %367 = vmatpush1.msra.mxu0 0.0
        %368 = vmatprep.mubr.f32.mxu0 0.0
        %369 = vmatmul.mubr.f32.gmra.mrb[0].mxu0 %v302
        %v370 = vpop.f32.mrb[0].mxu0
        %v371 = vadd.f32 0.0, %v370
        %v372 = vpop.f32.mrb[0].mxu0
        %373 = vdwg.mxu0
        %p374 = scmp.eq.s32.totalorder %s28, 0
        // Predicated region
        $region41: #{tpu_custom_call.1} parent=35 // pred_check
          %p375 = pneg %p374
        $region42: #{tpu_custom_call.1} parent=35 // pred_check_branch
          %377 = sbr.rel (%p375) target = $region44
        $region43: #{tpu_custom_call.1} parent=35 // pred_region
          %378 = vst [vmem:[#allocation2] sm:$0xff] 0.0
        $region44: #{tpu_custom_call.1} parent=35 // pred_fallthru
          _
        %v379 = vld [vmem:[#allocation2] sm:$0xff]
        %v380 = vadd.f32 %v379, %v371
        %381 = vst [vmem:[#allocation2] sm:$0xff] %v380
        %s382 = smul.u32 %s28, 128
        %s383 = sshra.s32 %s382, 7
        %s384 = sand.u32 %s382, 127
        %s385 = scalar_lea.vmem %s278, %s383 [#allocation6]
        %386 = vst [vmem:[%s385] sm:$0xff] %v371
        // Predicated region
        $region45: #{tpu_custom_call.1} parent=35 // pred_check
          %p387 = pneg %p374
        $region46: #{tpu_custom_call.1} parent=35 // pred_check_branch
          %389 = sbr.rel (%p387) target = $region48
        $region47: #{tpu_custom_call.1} parent=35 // pred_region
          %v390 = vld [vmem:[#allocation2] sm:$0xff]
          %391 = vadd.xlane.f32.xlu0 %v390
          %v392 = vpop.xlane.xlu0 %391
          %v393 = vmul.f32 %v392, 0.015625
          %v394 = vld [vmem:[%s278] sm:$0xff]
          %v395 = vlaneseq
          %v396 = vand.u32 %v395, 127
          %v397 = vstv 0
          %v398 = vadd.s32 %v397, %v396
          %vm399 = vcmp.lt.s32.totalorder %v398, 64
          %v400 = vsub.f32 %v394, %v393
          %v401 = vsel %vm399, 1, 0
          %vm402 = vcmp.eq.s32.totalorder %v401, 1
          %v403 = vsel %vm402, %v400, 0.0
          %v404 = vmul.f32 %v403, %v403
          %405 = vadd.xlane.f32.xlu0 %v404
          %v406 = vpop.xlane.xlu0 %405
          %v407 = vadd.f32 %v406, 0.0
          %v408 = vmul.f32 %v407, 0.015625
          %v409 = vld [vmem:[%s286] sm:$0xff]
          %v410 = vadd.f32 %v408, 1e-05
          %v411 = vrsqrt.pop %v410
          %v412 = vmul.f32 %v409, %v411
          %v413 = vld [vmem:[%s290] sm:$0xff]
          %v414 = vmul.f32 %v393, %v412
          %v415 = vsub.f32 %v413, %v414
          %417 = vset.pattern.permute.xlu0 0
          %418 = vperm.xlu0 %417, %v412
          %v419 = vpop.permute.xlu0 %418
          %v421 = vmul.f32 %v394, %v419
          %423 = vset.pattern.permute.xlu0 0
          %424 = vperm.xlu0 %423, %v415
          %v425 = vpop.permute.xlu0 %424
          %v427 = vadd.f32 %v421, %v425
          %v428 = vmul.f32 %v427, 0.2
          %v429 = vmax.f32 %v427, %v428
          %430 = vst [vmem:[%s278] sm:$0xff] %v429
        $region48: #{tpu_custom_call.1} parent=35 // pred_fallthru
          _
        %s431 = sand.u32 %s156, 1
        %s432 = scalar_lea.sflag [#allocation5], %s431
        %s433 = sand.u32 %s156, 1
        %s434 = smul.addr %s433, 8
        %s435 = scalar_lea.vmem [#allocation6], %s434
        // Predicated region
        $region49: #{tpu_custom_call.1} parent=35 // pred_check
          %p436 = pneg %p166
        $region50: #{tpu_custom_call.1} parent=35 // pred_check_branch
          %438 = sbr.rel (%p436) target = $region52
        $region51: #{tpu_custom_call.1} parent=35 // pred_region
          %s440 = ssub.s32 128, 128
          %441 = vsyncadd %s432, %s440
          %s442 = sadd.s32 %s27, %s26
          %s443 = smul.addr %s442, 128
          %s444 = scalar_lea.hbm %s4, %s443
          %s446 = sshll.u32 %s435, 4
          %s447 = int_to_ptr.vmem [resolvable:$true] %s446
          %449 = dma.vmem_to_hbm [thread:$0]  %s447, 128, %s444, %s432
        $region52: #{tpu_custom_call.1} parent=35 // pred_fallthru
          _
      $region36: #{tpu_custom_call.1} parent=5 // pred_fallthru
        _
      %p450 = scmp.le.s32.totalorder 2, %s16
      // Predicated region
      $region53: #{tpu_custom_call.1} parent=5 // pred_check
        %p451 = pneg %p450
      $region54: #{tpu_custom_call.1} parent=5 // pred_check_branch
        %453 = sbr.rel (%p451) target = $region56
      $region55: #{tpu_custom_call.1} parent=5 // pred_region
        %s454 = ssub.s32 %s16, 2
        // Predicated region
        $region57: #{tpu_custom_call.1} parent=55 // pred_check
          %p455 = pneg %p172
        $region58: #{tpu_custom_call.1} parent=55 // pred_check_branch
          %457 = sbr.rel (%p455) target = $region60
        $region59: #{tpu_custom_call.1} parent=55 // pred_region
          %s458 = sand.u32 %s157, 1
          %s459 = scalar_lea.sflag [#allocation5], %s458
          %s460 = sand.u32 %s157, 1
          %s461 = smul.addr %s460, 8
          %s462 = scalar_lea.vmem [#allocation6], %s461
          %463 = dma.done %s459, 128
        $region60: #{tpu_custom_call.1} parent=55 // pred_fallthru
          _
      $region56: #{tpu_custom_call.1} parent=5 // pred_fallthru
        _
    $region6: #{tpu_custom_call.1} parent=1 // loop_footer
      %s20 = sadd.s32 1, %s16
    $region7: #{tpu_custom_call.1} parent=1 // loop_footer_branch
      %15 = sbr.rel target = $region3
    $region8: #{tpu_custom_call.1} parent=1 // loop_exit
      _
    %464 = vsyncpa [#allocation4], 1
    %s465 = scalar_lea.sflag [#allocation4], 1
    %466 = vsyncpa %s465, 1
    %467 = vsyncpa [#allocation5], 1
    %s468 = scalar_lea.sflag [#allocation5], 1
    %469 = vsyncpa %s468, 1

</llo_original>
